<compile_context>
chip_gen: v7x
topology: tpu7x:2x2x1
jax: 0.10.0
libtpu: 0.0.40
codegen_flags: <defaults>
</compile_context>

<pallas_src>
import functools

import jax
import jax.numpy as jnp
from jax.experimental import pallas as pl
from jax.experimental.pallas import tpu as pltpu


# ---------------------------------------------------------------------------
# Kernels
# ---------------------------------------------------------------------------
def _fliproll_kernel(real_ref, out_ref):
    """Primary kernel: permutation via flip + roll (XLU), then blend + sigmoid."""
    x = real_ref[...]                          # (Cb, H, W) float32 block
    f = jnp.flip(x, axis=(-2, -1))             # reverse both spatial axes
    f = pltpu.roll(f, shift=1, axis=2)         # rotate by 1 along W (lanes)
    f = pltpu.roll(f, shift=1, axis=1)         # rotate by 1 along H (sublanes)
    out_ref[...] = jax.nn.sigmoid(0.5 * (x + f)).astype(out_ref.dtype)


def _matmul_kernel(a_ref, b_ref, real_ref, out_ref):
    """Portability fallback: permutation expressed as two 0/1 f32 matmuls.

    A (H,H) and B (W,W) are built once on the host and reused across the grid
    (no per-step iota/where rebuild).  Only used if the flip/roll formulation
    does not lower (or does not match jnp.roll semantics) on this build.
    f32 is kept (0/1 matrices => the matmul is an exact permutation).
    """
    x = real_ref[0]                                                     # (H, W)
    t = jnp.dot(a_ref[...], x, preferred_element_type=jnp.float32)     # rows: i -> (-i)%H
    f = jnp.dot(t, b_ref[...], preferred_element_type=jnp.float32)     # cols: j -> (-j)%W
    out_ref[0] = jax.nn.sigmoid(0.5 * (x + f)).astype(out_ref.dtype)


# ---------------------------------------------------------------------------
# Device-aware sizing
# ---------------------------------------------------------------------------
@functools.lru_cache(maxsize=None)
def _device_profile():
    """-> (target_block_bytes, vmem_limit_bytes, assume_two_tensorcores)."""
    vmem = None
    try:
        vmem = getattr(pltpu.get_tpu_info(), "vmem_capacity_bytes", None)
    except Exception:
        vmem = None
    if vmem is not None and vmem > 64 * 1024 * 1024:
        # v5e / v6e class: 128 MiB VMEM, single TensorCore -> big blocks, no
        # forced grid split.
        return 4 * 1024 * 1024, 48 * 1024 * 1024, False
    # v7x class (64 MiB VMEM per TC, 2 TCs) or unknown device -> conservative
    # block/limit, allow splitting the channel axis across cores.
    return 2 * 1024 * 1024, 32 * 1024 * 1024, True


def _channels_per_block(C, H, W, target_bytes, two_cores):
    per_channel_bytes = H * W * 4
    cb = max(1, min(C, target_bytes // max(1, per_channel_bytes)))
    if two_cores and C >= 2:
        half = -(-C // 2)
        # Only split across TensorCores when each core's share is large enough
        # (~512 KiB) for the split to beat the extra per-step overhead.
        if half * per_channel_bytes >= 512 * 1024:
            cb = min(cb, half)
    return cb


# ---------------------------------------------------------------------------
# pallas_call builders (cached per shape)
# ---------------------------------------------------------------------------
@functools.lru_cache(maxsize=None)
def _make_fliproll_call(C, H, W):
    target_bytes, vmem_limit, two_cores = _device_profile()
    cb = _channels_per_block(C, H, W, target_bytes, two_cores)
    grid = (pl.cdiv(C, cb),)
    block = (cb, H, W)
    n = C * H * W
    # NOTE: for W not a multiple of 128 the output stores become masked
    # (vst.msk); acceptable here, W=128-class shapes are lane-dense already.
    return pl.pallas_call(
        _fliproll_kernel,
        out_shape=jax.ShapeDtypeStruct((C, H, W), jnp.float32),
        grid_spec=pltpu.PrefetchScalarGridSpec(
            num_scalar_prefetch=0,
            grid=grid,
            in_specs=[pl.BlockSpec(block, lambda c: (c, 0, 0))],
            out_specs=pl.BlockSpec(block, lambda c: (c, 0, 0)),
        ),
        compiler_params=pltpu.CompilerParams(
            dimension_semantics=("parallel",),
            vmem_limit_bytes=vmem_limit,
        ),
        cost_estimate=pl.CostEstimate(
            flops=2 * n,            # the blend is the only FLOP work; flip/roll is data movement
            transcendentals=n,      # sigmoid
            bytes_accessed=2 * n * 4,
        ),
    )


@functools.lru_cache(maxsize=None)
def _make_matmul_call(C, H, W):
    _, vmem_limit, _ = _device_profile()
    # Mirror-permutation matrices, built once on the host.
    ih = jax.lax.broadcasted_iota(jnp.int32, (H, H), 0)
    kh = jax.lax.broadcasted_iota(jnp.int32, (H, H), 1)
    A = jnp.where((ih + kh == 0) | (ih + kh == H), 1.0, 0.0).astype(jnp.float32)
    lw = jax.lax.broadcasted_iota(jnp.int32, (W, W), 0)
    jw = jax.lax.broadcasted_iota(jnp.int32, (W, W), 1)
    B = jnp.where((lw + jw == 0) | (lw + jw == W), 1.0, 0.0).astype(jnp.float32)
    call = pl.pallas_call(
        _matmul_kernel,
        out_shape=jax.ShapeDtypeStruct((C, H, W), jnp.float32),
        grid_spec=pltpu.PrefetchScalarGridSpec(
            num_scalar_prefetch=0,
            grid=(C,),
            in_specs=[
                pl.BlockSpec((H, H), lambda c: (0, 0)),      # A, reused across grid
                pl.BlockSpec((W, W), lambda c: (0, 0)),      # B, reused across grid
                pl.BlockSpec((1, H, W), lambda c: (c, 0, 0)),
            ],
            out_specs=pl.BlockSpec((1, H, W), lambda c: (c, 0, 0)),
        ),
        compiler_params=pltpu.CompilerParams(
            dimension_semantics=("parallel",),
            vmem_limit_bytes=vmem_limit,
        ),
    )
    return lambda real: call(A, B, real)


# ---------------------------------------------------------------------------
# Reference + one-time path selection (outside the hot path)
# ---------------------------------------------------------------------------
def _reference(real):
    flipped = jnp.flip(real, axis=(-2, -1))
    flipped = jnp.roll(flipped, shift=1, axis=-1)
    flipped = jnp.roll(flipped, shift=1, axis=-2)
    return jax.nn.sigmoid(0.5 * (real + flipped))


@functools.lru_cache(maxsize=None)
def _select_call(C, H, W):
    """Resolve fliproll-vs-fallback once per shape, validating on the ACTUAL shape."""
    try:
        call = _make_fliproll_call(C, H, W)
        x = jax.random.normal(jax.random.PRNGKey(1), (C, H, W), dtype=jnp.float32)
        out = jax.block_until_ready(call(x))
        if bool(jnp.allclose(out, _reference(x), atol=1e-5, rtol=1e-5)):
            return call
    except Exception:
        pass
    # Emergency path only; never taken if flip/pltpu.roll lower with jnp semantics.
    return _make_matmul_call(C, H, W)


def hermitian_symmetric_forward(real):
    """real: (C, H, W) float32 parameter -> sigmoid(0.5*(real + hermitian_flip(real))).

    Hot path: a single cached pallas_call per shape (no host sync, no try/except),
    so it composes cleanly under jit.
    """
    C, H, W = real.shape
    return _select_call(C, H, W)(real)


if __name__ == "__main__":
    # The torch module initializes the parameter with zeros (degenerate:
    # sigmoid(0) everywhere), so exercise the kernel with deterministic random
    # values instead.  Shape matches the module: (C, H, W).
    C, H, W = 3, 16, 128
    key = jax.random.PRNGKey(0)
    real = jax.random.normal(key, (C, H, W), dtype=jnp.float32)

    out = jax.block_until_ready(hermitian_symmetric_forward(real))

    ref = _reference(real)
    assert out.shape == (C, H, W)
    assert jnp.allclose(out, ref, atol=1e-5, rtol=1e-5), "mismatch vs reference"
    print("KERNEL_OK")
</pallas_src>

<mosaic_0001>
module attributes {stable_mosaic.version = 11 : i64} {
  func.func @_matmul_kernel(%arg0: i32, %arg1: memref<16x16xf32, #tpu.memory_space<vmem>>, %arg2: memref<128x128xf32, #tpu.memory_space<vmem>>, %arg3: memref<1x16x128xf32, #tpu.memory_space<vmem>>, %arg4: memref<1x16x128xf32, #tpu.memory_space<vmem>>) attributes {dimension_semantics = [#tpu.dimension_semantics<parallel>], iteration_bounds = array<i64: 3>, scalar_prefetch = 0 : i64, scratch_operands = 0 : i64, tpu.core_type = #tpu.core_type<tc>, window_params = [{pipeline_mode = #tpu.pipeline_mode<synchronous>, transform_indices = @transform_0, window_bounds = array<i64: 16, 16>}, {pipeline_mode = #tpu.pipeline_mode<synchronous>, transform_indices = @transform_1, window_bounds = array<i64: 128, 128>}, {transform_indices = @transform_2, window_bounds = array<i64: 1, 16, 128>}, {transform_indices = @transform_3, window_bounds = array<i64: 1, 16, 128>}]} {
    %c0 = arith.constant 0 : index
    %c0_0 = arith.constant 0 : index
    %c0_1 = arith.constant 0 : index
    %0 = vector.load %arg3[%c0, %c0_0, %c0_1] : memref<1x16x128xf32, #tpu.memory_space<vmem>>, vector<1x16x128xf32>
    %1 = vector.shape_cast %0 : vector<1x16x128xf32> to vector<16x128xf32>
    %c0_2 = arith.constant 0 : index
    %c0_3 = arith.constant 0 : index
    %2 = vector.load %arg1[%c0_2, %c0_3] : memref<16x16xf32, #tpu.memory_space<vmem>>, vector<16x16xf32>
    %cst = arith.constant dense<0.000000e+00> : vector<16x128xf32>
    %3 = tpu.matmul %2, %1, %cst {dimension_numbers = #tpu.dot_dimension_numbers<[1], [0], [0], [1], [0, 0, 1, 1], [], []>} : vector<16x16xf32>, vector<16x128xf32>, vector<16x128xf32> -> vector<16x128xf32>
    %c0_4 = arith.constant 0 : index
    %c0_5 = arith.constant 0 : index
    %4 = vector.load %arg2[%c0_4, %c0_5] : memref<128x128xf32, #tpu.memory_space<vmem>>, vector<128x128xf32>
    %cst_6 = arith.constant dense<0.000000e+00> : vector<16x128xf32>
    %5 = tpu.matmul %3, %4, %cst_6 {dimension_numbers = #tpu.dot_dimension_numbers<[1], [0], [0], [1], [0, 0, 1, 1], [], []>} : vector<16x128xf32>, vector<128x128xf32>, vector<16x128xf32> -> vector<16x128xf32>
    %6 = arith.addf %1, %5 : vector<16x128xf32>
    %cst_7 = arith.constant 5.000000e-01 : f32
    %7 = vector.broadcast %cst_7 : f32 to vector<16x128xf32>
    %8 = arith.mulf %7, %6 : vector<16x128xf32>
    %9 = arith.negf %8 : vector<16x128xf32>
    %10 = math.exp %9 : vector<16x128xf32>
    %cst_8 = arith.constant 1.000000e+00 : f32
    %11 = vector.broadcast %cst_8 : f32 to vector<16x128xf32>
    %12 = arith.addf %11, %10 : vector<16x128xf32>
    %13 = arith.divf %11, %12 : vector<16x128xf32>
    %c0_9 = arith.constant 0 : index
    %c0_10 = arith.constant 0 : index
    %c0_11 = arith.constant 0 : index
    %14 = vector.load %arg4[%c0_9, %c0_10, %c0_11] : memref<1x16x128xf32, #tpu.memory_space<vmem>>, vector<1x16x128xf32>
    %15 = vector.shape_cast %14 : vector<1x16x128xf32> to vector<16x128xf32>
    %16 = vector.shape_cast %13 : vector<16x128xf32> to vector<1x16x128xf32>
    tpu.vector_store %arg4[%c0_9, %c0_10, %c0_11], %16 {strides = array<i32>} : memref<1x16x128xf32, #tpu.memory_space<vmem>>, vector<1x16x128xf32>,
    return
  }
  func.func @transform_0(%arg0: i32) -> (i32, i32) {
    %c0_i32 = arith.constant 0 : i32
    %c0_i32_0 = arith.constant 0 : i32
    %c0_i32_1 = arith.constant 0 : i32
    return %c0_i32, %c0_i32_0 : i32, i32
  }
  func.func @transform_1(%arg0: i32) -> (i32, i32) {
    %c0_i32 = arith.constant 0 : i32
    %c0_i32_0 = arith.constant 0 : i32
    %c0_i32_1 = arith.constant 0 : i32
    return %c0_i32, %c0_i32_0 : i32, i32
  }
  func.func @transform_2(%arg0: i32) -> (i32, i32, i32) {
    %c0_i32 = arith.constant 0 : i32
    %c0_i32_0 = arith.constant 0 : i32
    %c0_i32_1 = arith.constant 0 : i32
    return %arg0, %c0_i32, %c0_i32_0 : i32, i32, i32
  }
  func.func @transform_3(%arg0: i32) -> (i32, i32, i32) {
    %c0_i32 = arith.constant 0 : i32
    %c0_i32_0 = arith.constant 0 : i32
    %c0_i32_1 = arith.constant 0 : i32
    return %arg0, %c0_i32, %c0_i32_0 : i32, i32, i32
  }
}

</mosaic_0001>

<llo_original>
// kernel: tpu_custom_call.1
$region0: #{tpu_custom_call.1}
  #allocation0 [shape = 'u32[]', space=smem, size = 0x4, offset = 0x4, fixed_abs, tag = 'smem constant byte address 0x4 - core index']
  #allocation1 [shape = 'u32[144,128]{1,0:T(1,128)}', space=vmem, size = 0x12000, scoped, tag = 'internal scratch']
  %s0 = inlined_call_operand.hbm [shape: f32[16,16], index: 0, kind: input, shape index: {}]
  %s1 = inlined_call_operand.hbm [shape: f32[128,128], index: 1, kind: input, shape index: {}]
  %s2 = inlined_call_operand.hbm [shape: f32[3,16,128], index: 2, kind: input, shape index: {}]
  %s3 = inlined_call_operand.hbm [shape: f32[3,16,128], index: 3, kind: output, shape index: {}]
  %s4 = sld [smem:[#allocation0]]
  $region57: #{tpu_custom_call.1} parent=0
    _
  %s6 = ssub.s32 1, %s4
  %s7 = scalar_select 0, %s6, %s4
  $region1: #{tpu_custom_call.1} parent=0
    #allocation2 [shape = 'u8[8192]{0}', space=vmem, size = 0x2000, scoped, tag = 'input window, operand 0, single buffered']
    #allocation3 [shape = 's32[2]{0}', space=sflag, size = 0x8, scoped, tag = 'scoped memory for tpu_custom_call.1']
    #allocation4 [shape = 's32[2]{0}', space=sflag, size = 0x8, scoped, tag = 'scoped memory for tpu_custom_call.1']
    #allocation5 [shape = 'u8[65536]{0}', space=vmem, size = 0x10000, scoped, tag = 'input window, operand 1, single buffered']
    #allocation6 [shape = 's32[1]{0}', space=sflag, size = 0x4, scoped, tag = 'scoped memory for tpu_custom_call.1']
    #allocation7 [shape = 'u8[16384]{0}', space=vmem, size = 0x4000, scoped, tag = 'input window, operand 2']
    #allocation8 [shape = 'u8[16384]{0}', space=vmem, size = 0x4000, scoped, tag = 'output window, operand 0']
    %8 = vsyncpa [#allocation3], 0
    %9 = vsyncpa [#allocation6], 0
    %10 = vsyncpa [#allocation4], 0
    %s11 = scalar_lea.sflag [#allocation4], 1
    %12 = vsyncpa %s11, 0
    loop: start=0, step=1, limit=5
    $region2: #{tpu_custom_call.1} parent=1 // loop_pre_header
      _
    $region3: #{tpu_custom_call.1} parent=1 // loop_header
      %s14 = sphi 0, %s18
      %p15 = scmp.ge.s32.totalorder %s14, 5
      %s22 = sphi 0, %s22
      %s24 = sphi 0, %s22
      %s25 = sphi 0, %s24
      %s39 = sphi 0, %s25
      %s43 = sphi 0, %s43
      %s45 = sphi 0, %s43
      %s46 = sphi 0, %s45
      %s60 = sphi 0, %s46
      %s66 = sphi 0, %s68
      %s69 = sphi 0, %s66
      %s70 = sphi 0, %s69
      %s86 = sphi 0, %s70
      %s92 = sphi 0, %s94
      %s95 = sphi 0, %s92
      %s96 = sphi 0, %s95
      %s112 = sphi 0, %s96
    $region4: #{tpu_custom_call.1} parent=1 // loop_header_branch
      %17 = sbr.rel (%p15) target = $region8
    $region5: #{tpu_custom_call.1} parent=1 // loop_body
      %s19 = ssub.s32 %s14, 1
      %s20 = ssub.s32 %s14, 2
      %s21 = sadd.s32 %s14, 1
      %s23 = sadd.s32 %s22, 1
      %p26 = scmp.eq.s32.totalorder %s14, 2
      %p27 = scmp.ne.s32.totalorder %s22, %s24
      %p28 = scmp.eq.s32.totalorder %s14, 0
      %p29 = por %p27, %p28
      %p30 = scmp.ne.s32.totalorder %s22, %s24
      %p31 = scmp.eq.s32.totalorder %s19, 2
      %p32 = por %p30, %p31
      %p33 = scmp.ne.s32.totalorder %s24, %s25
      %p34 = scmp.eq.s32.totalorder %s19, 0
      %p35 = por %p33, %p34
      %p36 = scmp.ne.s32.totalorder %s24, %s25
      %p37 = scmp.eq.s32.totalorder %s20, 2
      %p38 = por %p36, %p37
      %p40 = scmp.ne.s32.totalorder %s25, %s39
      %p41 = scmp.eq.s32.totalorder %s20, 0
      %p42 = por %p40, %p41
      %s44 = sadd.s32 %s43, 1
      %p47 = scmp.eq.s32.totalorder %s14, 2
      %p48 = scmp.ne.s32.totalorder %s43, %s45
      %p49 = scmp.eq.s32.totalorder %s14, 0
      %p50 = por %p48, %p49
      %p51 = scmp.ne.s32.totalorder %s43, %s45
      %p52 = scmp.eq.s32.totalorder %s19, 2
      %p53 = por %p51, %p52
      %p54 = scmp.ne.s32.totalorder %s45, %s46
      %p55 = scmp.eq.s32.totalorder %s19, 0
      %p56 = por %p54, %p55
      %p57 = scmp.ne.s32.totalorder %s45, %s46
      %p58 = scmp.eq.s32.totalorder %s20, 2
      %p59 = por %p57, %p58
      %p61 = scmp.ne.s32.totalorder %s46, %s60
      %p62 = scmp.eq.s32.totalorder %s20, 0
      %p63 = por %p61, %p62
      %s64 = ssub.s32 %s14, %s21
      %p65 = scmp.eq.s32.totalorder %s64, 0
      %s67 = sadd.s32 %s66, 1
      %s68 = scalar_select %p65, %s66, %s67
      %p71 = pneg %p65
      %p72 = scmp.eq.s32.totalorder %s14, 2
      %p73 = por %p71, %p72
      %p74 = scmp.ne.s32.totalorder %s66, %s69
      %p75 = scmp.eq.s32.totalorder %s14, 0
      %p76 = por %p74, %p75
      %p77 = scmp.ne.s32.totalorder %s66, %s69
      %p78 = scmp.eq.s32.totalorder %s19, 2
      %p79 = por %p77, %p78
      %p80 = scmp.ne.s32.totalorder %s69, %s70
      %p81 = scmp.eq.s32.totalorder %s19, 0
      %p82 = por %p80, %p81
      %p83 = scmp.ne.s32.totalorder %s69, %s70
      %p84 = scmp.eq.s32.totalorder %s20, 2
      %p85 = por %p83, %p84
      %p87 = scmp.ne.s32.totalorder %s70, %s86
      %p88 = scmp.eq.s32.totalorder %s20, 0
      %p89 = por %p87, %p88
      %s90 = ssub.s32 %s14, %s21
      %p91 = scmp.eq.s32.totalorder %s90, 0
      %s93 = sadd.s32 %s92, 1
      %s94 = scalar_select %p91, %s92, %s93
      %p97 = pneg %p91
      %p98 = scmp.eq.s32.totalorder %s14, 2
      %p99 = por %p97, %p98
      %p100 = scmp.ne.s32.totalorder %s92, %s95
      %p101 = scmp.eq.s32.totalorder %s14, 0
      %p102 = por %p100, %p101
      %p103 = scmp.ne.s32.totalorder %s92, %s95
      %p104 = scmp.eq.s32.totalorder %s19, 2
      %p105 = por %p103, %p104
      %p106 = scmp.ne.s32.totalorder %s95, %s96
      %p107 = scmp.eq.s32.totalorder %s19, 0
      %p108 = por %p106, %p107
      %p109 = scmp.ne.s32.totalorder %s95, %s96
      %p110 = scmp.eq.s32.totalorder %s20, 2
      %p111 = por %p109, %p110
      %p113 = scmp.ne.s32.totalorder %s96, %s112
      %p114 = scmp.eq.s32.totalorder %s20, 0
      %p115 = por %p113, %p114
      %p116 = scmp.le.s32.totalorder 1, %s14
      %p117 = scmp.lt.s32.totalorder %s14, 4
      %p118 = pnand %p116, %p117
      %p119 = pneg %p118
      // Predicated region
      $region9: #{tpu_custom_call.1} parent=5 // pred_check
        _
      $region10: #{tpu_custom_call.1} parent=5 // pred_check_branch
        %121 = sbr.rel (%p118) target = $region12
      $region11: #{tpu_custom_call.1} parent=5 // pred_region
        %s122 = ssub.s32 %s14, 1
        // Predicated region
        $region13: #{tpu_custom_call.1} parent=11 // pred_check
          %p123 = pneg %p35
        $region14: #{tpu_custom_call.1} parent=11 // pred_check_branch
          %125 = sbr.rel (%p123) target = $region16
        $region15: #{tpu_custom_call.1} parent=11 // pred_region
          %s127 = ssub.s32 256, 256
          %128 = vsyncadd [#allocation3], %s127
          %s129 = sshll.u32 [#allocation2], 4
          %s130 = int_to_ptr.vmem [resolvable:$true] %s129
          %135 = dma.hbm_to_vmem [thread:$0]  %s0, 256, %s130, [#allocation3], 128, 128, 8
        $region16: #{tpu_custom_call.1} parent=11 // pred_fallthru
          _
        // Predicated region
        $region17: #{tpu_custom_call.1} parent=11 // pred_check
          %p136 = pneg %p56
        $region18: #{tpu_custom_call.1} parent=11 // pred_check_branch
          %138 = sbr.rel (%p136) target = $region20
        $region19: #{tpu_custom_call.1} parent=11 // pred_region
          %s140 = ssub.s32 2048, 2048
          %141 = vsyncadd [#allocation6], %s140
          %s142 = sshll.u32 [#allocation5], 4
          %s143 = int_to_ptr.vmem [resolvable:$true] %s142
          %148 = dma.hbm_to_vmem [thread:$0]  %s1, 2048, %s143, [#allocation6], 128, 128, 8
        $region20: #{tpu_custom_call.1} parent=11 // pred_fallthru
          _
      $region12: #{tpu_custom_call.1} parent=5 // pred_fallthru
        _
      %p149 = scmp.lt.s32.totalorder %s14, 3
      // Predicated region
      $region21: #{tpu_custom_call.1} parent=5 // pred_check
        %p150 = pneg %p149
      $region22: #{tpu_custom_call.1} parent=5 // pred_check_branch
        %152 = sbr.rel (%p150) target = $region24
      $region23: #{tpu_custom_call.1} parent=5 // pred_region
        // Predicated region
        $region25: #{tpu_custom_call.1} parent=23 // pred_check
          %p153 = pneg %p76
        $region26: #{tpu_custom_call.1} parent=23 // pred_check_branch
          %155 = sbr.rel (%p153) target = $region28
        $region27: #{tpu_custom_call.1} parent=23 // pred_region
          %s156 = sand.u32 %s14, 1
          %s157 = scalar_lea.sflag [#allocation3], %s156
          %s158 = sand.u32 %s66, 1
          %s159 = smul.addr %s158, 16
          %s160 = scalar_lea.vmem [#allocation7], %s159
          %s162 = ssub.s32 256, 256
          %163 = vsyncadd %s157, %s162
          %s164 = smul.addr %s14, 2
          %s165 = smul.addr %s164, 128
          %s166 = scalar_lea.hbm %s2, %s165
          %s167 = sshll.u32 %s160, 4
          %s168 = int_to_ptr.vmem [resolvable:$true] %s167
          %173 = dma.hbm_to_vmem [thread:$0]  %s166, 256, %s168, %s157, 128, 128, 8
        $region28: #{tpu_custom_call.1} parent=23 // pred_fallthru
          _
      $region24: #{tpu_custom_call.1} parent=5 // pred_fallthru
        _
      %p174 = scmp.le.s32.totalorder 1, %s14
      %p175 = scmp.lt.s32.totalorder %s14, 4
      %p176 = pnand %p174, %p175
      %p177 = pneg %p176
      // Predicated region
      $region29: #{tpu_custom_call.1} parent=5 // pred_check
        _
      $region30: #{tpu_custom_call.1} parent=5 // pred_check_branch
        %179 = sbr.rel (%p176) target = $region32
      $region31: #{tpu_custom_call.1} parent=5 // pred_region
        %s180 = ssub.s32 %s14, 1
        // Predicated region
        $region33: #{tpu_custom_call.1} parent=31 // pred_check
          %p181 = pneg %p35
        $region34: #{tpu_custom_call.1} parent=31 // pred_check_branch
          %183 = sbr.rel (%p181) target = $region36
        $region35: #{tpu_custom_call.1} parent=31 // pred_region
          %184 = dma.done [#allocation3], 256
        $region36: #{tpu_custom_call.1} parent=31 // pred_fallthru
          _
        // Predicated region
        $region37: #{tpu_custom_call.1} parent=31 // pred_check
          %p185 = pneg %p56
        $region38: #{tpu_custom_call.1} parent=31 // pred_check_branch
          %187 = sbr.rel (%p185) target = $region40
        $region39: #{tpu_custom_call.1} parent=31 // pred_region
          %188 = dma.done [#allocation6], 2048
        $region40: #{tpu_custom_call.1} parent=31 // pred_fallthru
          _
        %s189 = sand.u32 %s19, 1
        %s190 = scalar_lea.sflag [#allocation3], %s189
        %s191 = sand.u32 %s69, 1
        %s192 = smul.addr %s191, 16
        %s193 = scalar_lea.vmem [#allocation7], %s192
        // Predicated region
        $region41: #{tpu_custom_call.1} parent=31 // pred_check
          %p194 = pneg %p82
        $region42: #{tpu_custom_call.1} parent=31 // pred_check_branch
          %196 = sbr.rel (%p194) target = $region44
        $region43: #{tpu_custom_call.1} parent=31 // pred_region
          %197 = dma.done %s190, 256
        $region44: #{tpu_custom_call.1} parent=31 // pred_fallthru
          _
        %p198 = pneg %p35
        %p199 = pneg %p32
        %p200 = pneg %p56
        %p201 = pneg %p53
        %s202 = sand.u32 %s19, 1
        %s203 = scalar_lea.sflag [#allocation3], %s202
        %s204 = sand.u32 %s69, 1
        %s205 = smul.addr %s204, 16
        %s206 = scalar_lea.vmem [#allocation7], %s205
        %p207 = pneg %p82
        %p208 = pneg %p79
        %p209 = pneg %p108
        %p210 = pneg %p105
        %s211 = sand.u32 %s95, 1
        %s212 = scalar_lea.sflag [#allocation4], %s211
        %s213 = sand.u32 %s95, 1
        %s214 = smul.addr %s213, 16
        %s215 = scalar_lea.vmem [#allocation8], %s214
        %v216 = vld [vmem:[%s193] sm:$0xff]
        %v217 = vld [vmem:[%s193 + $0x8] sm:$0xff]
        %v218 = vld [vmem:[#allocation2] sm:$0xff]
        %v219 = vld [vmem:[#allocation2 + $0x8] sm:$0xff]
        %vm220 = vcmask 130048
        %v222 = vsel %vm220, %v218, 0
        %v225 = vsel %vm220, %v219, 0
        %227 = vmatprep.subr.mxu0 0.0
        %228 = vmatpush1.msra.mxu0 %v216
        %229 = vmatprep.subr.mxu0 0.0
        %230 = vmatpush1.msra.mxu0 %v217
        %231 = vmatprep.subr.mxu0 0.0
        %232 = vmatpush1.msra.mxu0 0.0
        %233 = vmatprep.subr.mxu0 0.0
        %234 = vmatpush1.msra.mxu0 0.0
        %235 = vmatprep.subr.mxu0 0.0
        %236 = vmatpush1.msra.mxu0 0.0
        %237 = vmatprep.subr.mxu0 0.0
        %238 = vmatpush1.msra.mxu0 0.0
        %239 = vmatprep.subr.mxu0 0.0
        %240 = vmatpush1.msra.mxu0 0.0
        %241 = vmatprep.subr.mxu0 0.0
        %242 = vmatpush1.msra.mxu0 0.0
        %243 = vmatprep.subr.mxu0 0.0
        %244 = vmatpush1.msra.mxu0 0.0
        %245 = vmatprep.subr.mxu0 0.0
        %246 = vmatpush1.msra.mxu0 0.0
        %247 = vmatprep.subr.mxu0 0.0
        %248 = vmatpush1.msra.mxu0 0.0
        %249 = vmatprep.subr.mxu0 0.0
        %250 = vmatpush1.msra.mxu0 0.0
        %251 = vmatprep.subr.mxu0 0.0
        %252 = vmatpush1.msra.mxu0 0.0
        %253 = vmatprep.subr.mxu0 0.0
        %254 = vmatpush1.msra.mxu0 0.0
        %255 = vmatprep.subr.mxu0 0.0
        %256 = vmatpush1.msra.mxu0 0.0
        %257 = vmatprep.subr.mxu0 0.0
        %258 = vmatpush1.msra.mxu0 0.0
        %259 = vmatprep.subr.mxu0 0.0
        %260 = vmatpush1.msra.mxu0 0.0
        %261 = vmatprep.subr.mxu0 0.0
        %262 = vmatpush1.msra.mxu0 0.0
        %263 = vmatprep.subr.mxu0 0.0
        %264 = vmatpush1.msra.mxu0 0.0
        %265 = vmatprep.subr.mxu0 0.0
        %266 = vmatpush1.msra.mxu0 0.0
        %267 = vmatprep.subr.mxu0 0.0
        %268 = vmatpush1.msra.mxu0 0.0
        %269 = vmatprep.subr.mxu0 0.0
        %270 = vmatpush1.msra.mxu0 0.0
        %271 = vmatprep.subr.mxu0 0.0
        %272 = vmatpush1.msra.mxu0 0.0
        %273 = vmatprep.subr.mxu0 0.0
        %274 = vmatpush1.msra.mxu0 0.0
        %275 = vmatprep.subr.mxu0 0.0
        %276 = vmatpush1.msra.mxu0 0.0
        %277 = vmatprep.subr.mxu0 0.0
        %278 = vmatpush1.msra.mxu0 0.0
        %279 = vmatprep.subr.mxu0 0.0
        %280 = vmatpush1.msra.mxu0 0.0
        %281 = vmatprep.subr.mxu0 0.0
        %282 = vmatpush1.msra.mxu0 0.0
        %283 = vmatprep.subr.mxu0 0.0
        %284 = vmatpush1.msra.mxu0 0.0
        %285 = vmatprep.subr.mxu0 0.0
        %286 = vmatpush1.msra.mxu0 0.0
        %287 = vmatprep.subr.mxu0 0.0
        %288 = vmatpush1.msra.mxu0 0.0
        %289 = vmatprep.subr.mxu0 0.0
        %290 = vmatpush1.msra.mxu0 0.0
        %291 = vmatprep.mubr.f32.mxu0 0.0
        %292 = vmatmul.mubr.f32.gmra.mrb[0].mxu0 %v222
        %v293 = vpop.f32.mrb[0].mxu0
        %v294 = vadd.f32 0.0, %v293
        %v295 = vpop.f32.mrb[0].mxu0
        %296 = vmatprep.mubr.f32.mxu0 0.0
        %297 = vmatmul.mubr.f32.gmra.mrb[0].mxu0 %v225
        %v298 = vpop.f32.mrb[0].mxu0
        %v299 = vadd.f32 0.0, %v298
        %v300 = vpop.f32.mrb[0].mxu0
        %301 = vdwg.mxu0
        %v302 = vld [vmem:[#allocation5] sm:$0xff]
        %v303 = vld [vmem:[#allocation5 + $0x8] sm:$0xff]
        %v304 = vld [vmem:[#allocation5 + $0x10] sm:$0xff]
        %v305 = vld [vmem:[#allocation5 + $0x18] sm:$0xff]
        %v306 = vld [vmem:[#allocation5 + $0x20] sm:$0xff]
        %v307 = vld [vmem:[#allocation5 + $0x28] sm:$0xff]
        %v308 = vld [vmem:[#allocation5 + $0x30] sm:$0xff]
        %v309 = vld [vmem:[#allocation5 + $0x38] sm:$0xff]
        %v310 = vld [vmem:[#allocation5 + $0x40] sm:$0xff]
        %v311 = vld [vmem:[#allocation5 + $0x48] sm:$0xff]
        %v312 = vld [vmem:[#allocation5 + $0x50] sm:$0xff]
        %v313 = vld [vmem:[#allocation5 + $0x58] sm:$0xff]
        %v314 = vld [vmem:[#allocation5 + $0x60] sm:$0xff]
        %v315 = vld [vmem:[#allocation5 + $0x68] sm:$0xff]
        %v316 = vld [vmem:[#allocation5 + $0x70] sm:$0xff]
        %v317 = vld [vmem:[#allocation5 + $0x78] sm:$0xff]
        %318 = vmatprep.subr.mxu0 0.0
        %319 = vmatpush1.msra.mxu0 %v302
        %320 = vmatprep.subr.mxu0 0.0
        %321 = vmatpush1.msra.mxu0 %v303
        %322 = vmatprep.subr.mxu0 0.0
        %323 = vmatpush1.msra.mxu0 %v304
        %324 = vmatprep.subr.mxu0 0.0
        %325 = vmatpush1.msra.mxu0 %v305
        %326 = vmatprep.subr.mxu0 0.0
        %327 = vmatpush1.msra.mxu0 %v306
        %328 = vmatprep.subr.mxu0 0.0
        %329 = vmatpush1.msra.mxu0 %v307
        %330 = vmatprep.subr.mxu0 0.0
        %331 = vmatpush1.msra.mxu0 %v308
        %332 = vmatprep.subr.mxu0 0.0
        %333 = vmatpush1.msra.mxu0 %v309
        %334 = vmatprep.subr.mxu0 0.0
        %335 = vmatpush1.msra.mxu0 %v310
        %336 = vmatprep.subr.mxu0 0.0
        %337 = vmatpush1.msra.mxu0 %v311
        %338 = vmatprep.subr.mxu0 0.0
        %339 = vmatpush1.msra.mxu0 %v312
        %340 = vmatprep.subr.mxu0 0.0
        %341 = vmatpush1.msra.mxu0 %v313
        %342 = vmatprep.subr.mxu0 0.0
        %343 = vmatpush1.msra.mxu0 %v314
        %344 = vmatprep.subr.mxu0 0.0
        %345 = vmatpush1.msra.mxu0 %v315
        %346 = vmatprep.subr.mxu0 0.0
        %347 = vmatpush1.msra.mxu0 %v316
        %348 = vmatprep.subr.mxu0 0.0
        %349 = vmatpush1.msra.mxu0 %v317
        %350 = vmatprep.subr.mxu0 0.0
        %351 = vmatpush1.msra.mxu0 0.0
        %352 = vmatprep.subr.mxu0 0.0
        %353 = vmatpush1.msra.mxu0 0.0
        %354 = vmatprep.subr.mxu0 0.0
        %355 = vmatpush1.msra.mxu0 0.0
        %356 = vmatprep.subr.mxu0 0.0
        %357 = vmatpush1.msra.mxu0 0.0
        %358 = vmatprep.subr.mxu0 0.0
        %359 = vmatpush1.msra.mxu0 0.0
        %360 = vmatprep.subr.mxu0 0.0
        %361 = vmatpush1.msra.mxu0 0.0
        %362 = vmatprep.subr.mxu0 0.0
        %363 = vmatpush1.msra.mxu0 0.0
        %364 = vmatprep.subr.mxu0 0.0
        %365 = vmatpush1.msra.mxu0 0.0
        %366 = vmatprep.subr.mxu0 0.0
        %367 = vmatpush1.msra.mxu0 0.0
        %368 = vmatprep.subr.mxu0 0.0
        %369 = vmatpush1.msra.mxu0 0.0
        %370 = vmatprep.subr.mxu0 0.0
        %371 = vmatpush1.msra.mxu0 0.0
        %372 = vmatprep.subr.mxu0 0.0
        %373 = vmatpush1.msra.mxu0 0.0
        %374 = vmatprep.subr.mxu0 0.0
        %375 = vmatpush1.msra.mxu0 0.0
        %376 = vmatprep.subr.mxu0 0.0
        %377 = vmatpush1.msra.mxu0 0.0
        %378 = vmatprep.subr.mxu0 0.0
        %379 = vmatpush1.msra.mxu0 0.0
        %380 = vmatprep.subr.mxu0 0.0
        %381 = vmatpush1.msra.mxu0 0.0
        %382 = vmatprep.mubr.f32.mxu0 0.0
        %383 = vmatmul.mubr.f32.gmra.mrb[0].mxu0 %v294
        %v384 = vpop.f32.mrb[0].mxu0
        %v385 = vadd.f32 0.0, %v384
        %v386 = vpop.f32.mrb[0].mxu0
        %387 = vmatprep.mubr.f32.mxu0 0.0
        %388 = vmatmul.mubr.f32.gmra.mrb[0].mxu0 %v299
        %v389 = vpop.f32.mrb[0].mxu0
        %v390 = vadd.f32 0.0, %v389
        %v391 = vpop.f32.mrb[0].mxu0
        %392 = vdwg.mxu0
        %v393 = vadd.f32 %v216, %v385
        %v394 = vadd.f32 %v217, %v390
        %v395 = vmul.f32 %v393, 0.5
        %v396 = vmul.f32 %v394, 0.5
        %v397 = vxor.u32 %v395, 2147483648
        %v398 = vxor.u32 %v396, 2147483648
        %v399 = vmul.f32 %v397, 1.442695
        %v400 = vpow.pop %v399
        %v401 = vmul.f32 %v398, 1.442695
        %v402 = vpow.pop %v401
        %v403 = vadd.f32 %v400, 1.0
        %v404 = vadd.f32 %v402, 1.0
        %v405 = vrcp.pop %v403
        %v406 = vmul.f32 1.0, %v405
        %v407 = vrcp.pop %v404
        %v408 = vmul.f32 1.0, %v407
        %409 = vst [vmem:[%s215] sm:$0xff] %v406
        %410 = vst [vmem:[%s215 + $0x8] sm:$0xff] %v408
        %s411 = sand.u32 %s95, 1
        %s412 = scalar_lea.sflag [#allocation4], %s411
        %s413 = sand.u32 %s95, 1
        %s414 = smul.addr %s413, 16
        %s415 = scalar_lea.vmem [#allocation8], %s414
        // Predicated region
        $region45: #{tpu_custom_call.1} parent=31 // pred_check
          %p416 = pneg %p105
        $region46: #{tpu_custom_call.1} parent=31 // pred_check_branch
          %418 = sbr.rel (%p416) target = $region48
        $region47: #{tpu_custom_call.1} parent=31 // pred_region
          %s420 = ssub.s32 256, 256
          %421 = vsyncadd %s412, %s420
          %s422 = smul.addr %s19, 2
          %s423 = smul.addr %s422, 128
          %s424 = scalar_lea.hbm %s3, %s423
          %s425 = sshll.u32 %s415, 4
          %s426 = int_to_ptr.vmem [resolvable:$true] %s425
          %431 = dma.vmem_to_hbm [thread:$0]  %s426, 256, %s424, %s412, 128, 128, 8
        $region48: #{tpu_custom_call.1} parent=31 // pred_fallthru
          _
      $region32: #{tpu_custom_call.1} parent=5 // pred_fallthru
        _
      %p432 = scmp.le.s32.totalorder 2, %s14
      // Predicated region
      $region49: #{tpu_custom_call.1} parent=5 // pred_check
        %p433 = pneg %p432
      $region50: #{tpu_custom_call.1} parent=5 // pred_check_branch
        %435 = sbr.rel (%p433) target = $region52
      $region51: #{tpu_custom_call.1} parent=5 // pred_region
        %s436 = ssub.s32 %s14, 2
        // Predicated region
        $region53: #{tpu_custom_call.1} parent=51 // pred_check
          %p437 = pneg %p111
        $region54: #{tpu_custom_call.1} parent=51 // pred_check_branch
          %439 = sbr.rel (%p437) target = $region56
        $region55: #{tpu_custom_call.1} parent=51 // pred_region
          %s440 = sand.u32 %s96, 1
          %s441 = scalar_lea.sflag [#allocation4], %s440
          %s442 = sand.u32 %s96, 1
          %s443 = smul.addr %s442, 16
          %s444 = scalar_lea.vmem [#allocation8], %s443
          %445 = dma.done %s441, 256
        $region56: #{tpu_custom_call.1} parent=51 // pred_fallthru
          _
      $region52: #{tpu_custom_call.1} parent=5 // pred_fallthru
        _
    $region6: #{tpu_custom_call.1} parent=1 // loop_footer
      %s18 = sadd.s32 1, %s14
    $region7: #{tpu_custom_call.1} parent=1 // loop_footer_branch
      %13 = sbr.rel target = $region3
    $region8: #{tpu_custom_call.1} parent=1 // loop_exit
      _
    %446 = vsyncpa [#allocation3], 1
    %s447 = scalar_lea.sflag [#allocation3], 1
    %448 = vsyncpa %s447, 1
    %449 = vsyncpa [#allocation6], 1
    %450 = vsyncpa [#allocation4], 1
    %s451 = scalar_lea.sflag [#allocation4], 1
    %452 = vsyncpa %s451, 1

</llo_original>
